<compile_context>
chip_gen: v5e
topology: v5e:2x2
jax: 0.10.0
libtpu: 0.0.40
codegen_flags: <defaults>
</compile_context>

<pallas_src>
import functools

import jax
import jax.numpy as jnp
from jax.experimental import pallas as pl
from jax.experimental.pallas import tpu as pltpu

HIDDEN = 128
_LANE = 128                # lane width of a vreg
_IO_TARGET = 1 << 20       # ~1 MiB of streamed (x + out) bytes per grid step


def _round_up(a, m):
    return (a + m - 1) // m * m


def _mlp_kernel(x_ref, w1_ref, b1_ref, w2_ref, b2_ref, o_ref):
    # One batch tile per grid step; weights/biases fully resident in VMEM.
    x = x_ref[...].astype(w1_ref.dtype)                                # in-kernel cast (VPU, hidden under DMA)
    h = jnp.dot(x, w1_ref[...], preferred_element_type=jnp.float32)    # (tb, 128)   f32 acc on MXU
    h = jnp.maximum(h + b1_ref[...], 0.0)                              # bias + ReLU in f32 (VPU)
    y = jnp.dot(h.astype(w2_ref.dtype), w2_ref[...],                   # (tb, d_out) f32 acc on MXU
                preferred_element_type=jnp.float32)
    o_ref[...] = (y + b2_ref[...]).astype(o_ref.dtype)


def _hw_params():
    """Generation-aware VMEM budget, compiler limit and dual-TC flag."""
    vmem_cap = None
    try:
        vmem_cap = int(pltpu.get_tpu_info().vmem_capacity_bytes)
    except Exception:
        vmem_cap = None
    kind = ""
    try:
        kind = jax.devices()[0].device_kind.lower()
    except Exception:
        pass
    multi_core = ("v7" in kind) or ("tpu7" in kind)       # v7x: 2 TensorCores/chip
    if vmem_cap is None:
        vmem_cap = 64 * 1024 * 1024                        # conservative (v7x per-TC)
    if vmem_cap <= 64 * 1024 * 1024:                        # v7x
        budget = 24 * 1024 * 1024
        limit = 48 * 1024 * 1024
    else:                                                   # v5e / v6e (128 MiB)
        budget = 56 * 1024 * 1024
        limit = 96 * 1024 * 1024
    return budget, limit, multi_core


def _choose_block(B, block_b, d_in, d_out, x_bytes, out_bytes, cd_bytes,
                  row_align, vmem_budget, multi_core):
    """Batch tile: sized by streamed bytes, row-aligned, VMEM-budgeted, and
    split into >= 4 grid steps only on dual-TC parts (v7x)."""
    per_row_io = d_in * x_bytes + d_out * out_bytes
    target = pl.cdiv(_IO_TARGET, per_row_io)
    bb = max(row_align, _round_up(min(block_b, target), row_align))
    bb = min(bb, _round_up(B, row_align))

    # v7x only: want >= 4 grid steps (>= 2 per core) when the batch allows,
    # so each core keeps its input DMA double-buffered.
    if multi_core and B >= 4 * row_align and pl.cdiv(B, bb) < 4:
        bb = min(bb, max(row_align, _round_up(pl.cdiv(B, 4), row_align)))

    d_in_l = _round_up(d_in, _LANE)      # VMEM lane padding
    d_out_l = _round_up(d_out, _LANE)

    def footprint(b):
        xb = 2 * b * d_in_l * x_bytes                       # double-buffered x tile (lane-padded)
        ob = 2 * b * d_out_l * out_bytes                    # double-buffered out tile
        hb = b * HIDDEN * (4 + cd_bytes)                    # f32 hidden + compute-dtype copy
        wb = 2 * (d_in_l + d_out_l) * HIDDEN * cd_bytes     # weights: 2 buffers each
        sb = 2 * (HIDDEN + d_out_l) * 4                     # f32 biases: 2 buffers each
        return xb + ob + hb + wb + sb

    while bb > row_align and footprint(bb) > vmem_budget:
        bb = max(row_align, _round_up(bb // 2, row_align))
    return bb


@functools.partial(jax.jit, static_argnames=("block_b", "compute_dtype", "out_dtype"))
def state_encoder_forward(x, w1, b1, w2, b2, *, block_b=4096,
                          compute_dtype=jnp.bfloat16, out_dtype=None):
    B, d_in = x.shape
    d_out = w2.shape[1]
    od = jnp.dtype(x.dtype if out_dtype is None else out_dtype)
    cd = jnp.dtype(compute_dtype)
    x_bytes = jnp.dtype(x.dtype).itemsize

    vmem_budget, vmem_limit, multi_core = _hw_params()
    # keep batch-tile rows a multiple of the sublane-packing factor of the
    # narrowest streamed dtype (8 rows for f32, 16 for bf16, ...)
    row_align = 8 * max(1, 4 // min(x_bytes, od.itemsize))

    bb = _choose_block(B, block_b, d_in, d_out, x_bytes, od.itemsize,
                       cd.itemsize, row_align, vmem_budget, multi_core)

    # Weights cast once (tiny); biases kept f32 for the VPU add.
    w1c = w1.astype(cd)
    w2c = w2.astype(cd)
    b1c = b1.reshape(1, HIDDEN).astype(jnp.float32)
    b2c = b2.reshape(1, d_out).astype(jnp.float32)

    grid = (pl.cdiv(B, bb),)
    out = pl.pallas_call(
        _mlp_kernel,
        out_shape=jax.ShapeDtypeStruct((B, d_out), od),
        grid_spec=pltpu.PrefetchScalarGridSpec(
            num_scalar_prefetch=0,
            grid=grid,
            in_specs=[
                pl.BlockSpec((bb, d_in), lambda i: (i, 0)),        # x tile (original dtype)
                pl.BlockSpec((d_in, HIDDEN), lambda i: (0, 0)),    # W1 (resident)
                pl.BlockSpec((1, HIDDEN), lambda i: (0, 0)),       # b1
                pl.BlockSpec((HIDDEN, d_out), lambda i: (0, 0)),   # W2 (resident)
                pl.BlockSpec((1, d_out), lambda i: (0, 0)),        # b2
            ],
            out_specs=pl.BlockSpec((bb, d_out), lambda i: (i, 0)),  # lane dim = full array dim
        ),
        compiler_params=pltpu.CompilerParams(
            dimension_semantics=("parallel",),
            vmem_limit_bytes=vmem_limit,
        ),
    )(x, w1c, b1c, w2c, b2c)
    return out


def init_params(key, input_dim, feature_dim, dtype=jnp.float32):
    """Deterministic init mimicking PyTorch nn.Linear default (uniform +-1/sqrt(fan_in))."""
    k1, k2, k3, k4 = jax.random.split(key, 4)
    lim1 = 1.0 / jnp.sqrt(input_dim)
    lim2 = 1.0 / jnp.sqrt(HIDDEN)
    # stored as (in, out): transpose of PyTorch's weight layout
    w1 = jax.random.uniform(k1, (input_dim, HIDDEN), dtype, -lim1, lim1)
    b1 = jax.random.uniform(k2, (1, HIDDEN), dtype, -lim1, lim1)
    w2 = jax.random.uniform(k3, (HIDDEN, feature_dim), dtype, -lim2, lim2)
    b2 = jax.random.uniform(k4, (1, feature_dim), dtype, -lim2, lim2)
    return w1, b1, w2, b2


if __name__ == "__main__":
    key = jax.random.PRNGKey(0)
    kx, kp, kr = jax.random.split(key, 3)

    batch = 8
    input_dim = 32
    feature_dim = 16

    x = jax.random.normal(kx, (batch, input_dim), jnp.float32)
    w1, b1, w2, b2 = init_params(kp, input_dim, feature_dim)

    # Default (bf16-MXU, f32-accumulate) path.
    out = jax.block_until_ready(state_encoder_forward(x, w1, b1, w2, b2))
    assert out.shape == (batch, feature_dim) and out.dtype == x.dtype

    # References.
    ref_f32 = jnp.maximum(x @ w1 + b1, 0.0) @ w2 + b2
    cd = jnp.bfloat16
    h_ref = jnp.maximum(
        jnp.dot(x.astype(cd), w1.astype(cd), preferred_element_type=jnp.float32) + b1, 0.0)
    ref_bf16 = jnp.dot(h_ref.astype(cd), w2.astype(cd),
                       preferred_element_type=jnp.float32) + b2
    assert jnp.allclose(out, ref_bf16, atol=2e-3, rtol=2e-3)
    assert jnp.allclose(out, ref_f32, atol=5e-2, rtol=5e-2)

    # Exact-f32 path preserves the original module's numerics.
    out32 = jax.block_until_ready(
        state_encoder_forward(x, w1, b1, w2, b2, compute_dtype=jnp.float32))
    assert jnp.allclose(out32, ref_f32, atol=1e-5, rtol=1e-5)

    # Ragged batch (exercises the masked partial last block, no wrapper padding).
    xr = jax.random.normal(kr, (23, input_dim), jnp.float32)
    outr = jax.block_until_ready(
        state_encoder_forward(xr, w1, b1, w2, b2, compute_dtype=jnp.float32))
    refr = jnp.maximum(xr @ w1 + b1, 0.0) @ w2 + b2
    assert outr.shape == (23, feature_dim)
    assert jnp.allclose(outr, refr, atol=1e-5, rtol=1e-5)

    # Optional bf16 output store (halves output HBM traffic for tolerant consumers).
    out_bf = jax.block_until_ready(
        state_encoder_forward(x, w1, b1, w2, b2, out_dtype=jnp.bfloat16))
    assert out_bf.dtype == jnp.bfloat16
    assert jnp.allclose(out_bf.astype(jnp.float32), ref_f32, atol=6e-2, rtol=6e-2)

    print("KERNEL_OK")
</pallas_src>

<mosaic_0001>
module attributes {stable_mosaic.version = 11 : i64} {
  func.func @_mlp_kernel(%arg0: i32, %arg1: memref<8x32xf32, #tpu.memory_space<vmem>>, %arg2: memref<32x128xbf16, #tpu.memory_space<vmem>>, %arg3: memref<1x128xf32, #tpu.memory_space<vmem>>, %arg4: memref<128x16xbf16, #tpu.memory_space<vmem>>, %arg5: memref<1x16xf32, #tpu.memory_space<vmem>>, %arg6: memref<8x16xf32, #tpu.memory_space<vmem>>) attributes {dimension_semantics = [#tpu.dimension_semantics<parallel>], iteration_bounds = array<i64: 1>, scalar_prefetch = 0 : i64, scratch_operands = 0 : i64, tpu.core_type = #tpu.core_type<tc>, window_params = [{transform_indices = @transform_0, window_bounds = array<i64: 8, 32>}, {pipeline_mode = #tpu.pipeline_mode<synchronous>, transform_indices = @transform_1, window_bounds = array<i64: 32, 128>}, {pipeline_mode = #tpu.pipeline_mode<synchronous>, transform_indices = @transform_2, window_bounds = array<i64: 1, 128>}, {pipeline_mode = #tpu.pipeline_mode<synchronous>, transform_indices = @transform_3, window_bounds = array<i64: 128, 16>}, {pipeline_mode = #tpu.pipeline_mode<synchronous>, transform_indices = @transform_4, window_bounds = array<i64: 1, 16>}, {transform_indices = @transform_5, window_bounds = array<i64: 8, 16>}]} {
    %c0 = arith.constant 0 : index
    %c0_0 = arith.constant 0 : index
    %0 = vector.load %arg1[%c0, %c0_0] : memref<8x32xf32, #tpu.memory_space<vmem>>, vector<8x32xf32>
    %1 = arith.truncf %0 : vector<8x32xf32> to vector<8x32xbf16>
    %c0_1 = arith.constant 0 : index
    %c0_2 = arith.constant 0 : index
    %2 = vector.load %arg2[%c0_1, %c0_2] : memref<32x128xbf16, #tpu.memory_space<vmem>>, vector<32x128xbf16>
    %cst = arith.constant dense<0.000000e+00> : vector<8x128xf32>
    %3 = tpu.matmul %1, %2, %cst {dimension_numbers = #tpu.dot_dimension_numbers<[1], [0], [0], [1], [0, 0, 1, 1], [], []>} : vector<8x32xbf16>, vector<32x128xbf16>, vector<8x128xf32> -> vector<8x128xf32>
    %c0_3 = arith.constant 0 : index
    %c0_4 = arith.constant 0 : index
    %4 = vector.load %arg3[%c0_3, %c0_4] : memref<1x128xf32, #tpu.memory_space<vmem>>, vector<1x128xf32>
    %5 = vector.broadcast %4 : vector<1x128xf32> to vector<8x128xf32>
    %6 = arith.addf %3, %5 : vector<8x128xf32>
    %cst_5 = arith.constant 0.000000e+00 : f32
    %7 = vector.broadcast %cst_5 : f32 to vector<8x128xf32>
    %8 = arith.maximumf %6, %7 : vector<8x128xf32>
    %9 = arith.truncf %8 : vector<8x128xf32> to vector<8x128xbf16>
    %c0_6 = arith.constant 0 : index
    %c0_7 = arith.constant 0 : index
    %10 = vector.load %arg4[%c0_6, %c0_7] : memref<128x16xbf16, #tpu.memory_space<vmem>>, vector<128x16xbf16>
    %cst_8 = arith.constant dense<0.000000e+00> : vector<8x16xf32>
    %11 = tpu.matmul %9, %10, %cst_8 {dimension_numbers = #tpu.dot_dimension_numbers<[1], [0], [0], [1], [0, 0, 1, 1], [], []>} : vector<8x128xbf16>, vector<128x16xbf16>, vector<8x16xf32> -> vector<8x16xf32>
    %c0_9 = arith.constant 0 : index
    %c0_10 = arith.constant 0 : index
    %12 = vector.load %arg5[%c0_9, %c0_10] : memref<1x16xf32, #tpu.memory_space<vmem>>, vector<1x16xf32>
    %13 = vector.broadcast %12 : vector<1x16xf32> to vector<8x16xf32>
    %14 = arith.addf %11, %13 : vector<8x16xf32>
    %c0_11 = arith.constant 0 : index
    %c0_12 = arith.constant 0 : index
    %15 = vector.load %arg6[%c0_11, %c0_12] : memref<8x16xf32, #tpu.memory_space<vmem>>, vector<8x16xf32>
    tpu.vector_store %arg6[%c0_11, %c0_12], %14 {strides = array<i32>} : memref<8x16xf32, #tpu.memory_space<vmem>>, vector<8x16xf32>,
    return
  }
  func.func @transform_0(%arg0: i32) -> (i32, i32) {
    %c0_i32 = arith.constant 0 : i32
    %c0_i32_0 = arith.constant 0 : i32
    return %arg0, %c0_i32 : i32, i32
  }
  func.func @transform_1(%arg0: i32) -> (i32, i32) {
    %c0_i32 = arith.constant 0 : i32
    %c0_i32_0 = arith.constant 0 : i32
    %c0_i32_1 = arith.constant 0 : i32
    return %c0_i32, %c0_i32_0 : i32, i32
  }
  func.func @transform_2(%arg0: i32) -> (i32, i32) {
    %c0_i32 = arith.constant 0 : i32
    %c0_i32_0 = arith.constant 0 : i32
    %c0_i32_1 = arith.constant 0 : i32
    return %c0_i32, %c0_i32_0 : i32, i32
  }
  func.func @transform_3(%arg0: i32) -> (i32, i32) {
    %c0_i32 = arith.constant 0 : i32
    %c0_i32_0 = arith.constant 0 : i32
    %c0_i32_1 = arith.constant 0 : i32
    return %c0_i32, %c0_i32_0 : i32, i32
  }
  func.func @transform_4(%arg0: i32) -> (i32, i32) {
    %c0_i32 = arith.constant 0 : i32
    %c0_i32_0 = arith.constant 0 : i32
    %c0_i32_1 = arith.constant 0 : i32
    return %c0_i32, %c0_i32_0 : i32, i32
  }
  func.func @transform_5(%arg0: i32) -> (i32, i32) {
    %c0_i32 = arith.constant 0 : i32
    %c0_i32_0 = arith.constant 0 : i32
    return %arg0, %c0_i32 : i32, i32
  }
}

</mosaic_0001>

<llo_original>
// kernel: state_encoder_forward.1
$region0: #{state_encoder_forward.1}
  #allocation0 [shape = 'u32[]', space=smem, size = 0x4, offset = 0x4, fixed_abs, tag = 'smem constant byte address 0x4 - core index']
  #allocation1 [shape = 'u32[72,128]{1,0:T(1,128)}', space=vmem, size = 0x9000, scoped, tag = 'internal scratch']
  %s0 = inlined_call_operand.vmem [shape: f32[8,32], index: 0, kind: input, shape index: {}]
  %s1 = inlined_call_operand.vmem [shape: bf16[32,128], index: 1, kind: input, shape index: {}]
  %s2 = inlined_call_operand.vmem [shape: f32[1,128], index: 2, kind: input, shape index: {}]
  %s3 = inlined_call_operand.vmem [shape: bf16[128,16], index: 3, kind: input, shape index: {}]
  %s4 = inlined_call_operand.vmem [shape: f32[1,16], index: 4, kind: input, shape index: {}]
  %s5 = inlined_call_operand.hbm [shape: f32[8,16], index: 5, kind: output, shape index: {}]
  %s6 = sld [smem:[#allocation0]]
  $region30: #{state_encoder_forward.1} parent=0
    _
  %s8 = ssub.s32 1, %s6
  %s9 = scalar_select 0, %s8, %s6
  $region1: #{state_encoder_forward.1} parent=0
    #allocation2 [shape = 'u8[4096]{0}', space=vmem, size = 0x1000, scoped, tag = 'output window, operand 0, single buffered']
    #allocation3 [shape = 's32[1]{0}', space=sflag, size = 0x4, scoped, tag = 'scoped memory for state_encoder_forward.1']
    %10 = vsyncpa [#allocation3], 0
    // Predicated region
    $region2: #{state_encoder_forward.1} parent=1 // pred_check
      _
    $region3: #{state_encoder_forward.1} parent=1 // pred_check_branch
      %12 = sbr.rel (0) target = $region5
    $region4: #{state_encoder_forward.1} parent=1 // pred_region
      _
    $region5: #{state_encoder_forward.1} parent=1 // pred_fallthru
      _
    // Predicated region
    $region6: #{state_encoder_forward.1} parent=1 // pred_check
      _
    $region7: #{state_encoder_forward.1} parent=1 // pred_check_branch
      %14 = sbr.rel (0) target = $region9
    $region8: #{state_encoder_forward.1} parent=1 // pred_region
      _
    $region9: #{state_encoder_forward.1} parent=1 // pred_fallthru
      _
    // Predicated region
    $region10: #{state_encoder_forward.1} parent=1 // pred_check
      _
    $region11: #{state_encoder_forward.1} parent=1 // pred_check_branch
      %16 = sbr.rel (0) target = $region13
    $region12: #{state_encoder_forward.1} parent=1 // pred_region
      _
    $region13: #{state_encoder_forward.1} parent=1 // pred_fallthru
      _
    // Predicated region
    $region14: #{state_encoder_forward.1} parent=1 // pred_check
      _
    $region15: #{state_encoder_forward.1} parent=1 // pred_check_branch
      %18 = sbr.rel (0) target = $region17
    $region16: #{state_encoder_forward.1} parent=1 // pred_region
      _
    $region17: #{state_encoder_forward.1} parent=1 // pred_fallthru
      _
    // Predicated region
    $region18: #{state_encoder_forward.1} parent=1 // pred_check
      _
    $region19: #{state_encoder_forward.1} parent=1 // pred_check_branch
      %20 = sbr.rel (0) target = $region21
    $region20: #{state_encoder_forward.1} parent=1 // pred_region
      _
    $region21: #{state_encoder_forward.1} parent=1 // pred_fallthru
      _
    %v22 = vld [vmem:[%s0] sm:$0xff]
    %v23 = vpack.c.bf16 %v22, %v22
    %v24 = vld [vmem:[%s1] sm:$0xf]
    %v25 = vld [vmem:[%s1 + $0x4] sm:$0xf]
    %v26 = vld [vmem:[%s1 + $0x8] sm:$0xf]
    %v27 = vld [vmem:[%s1 + $0xc] sm:$0xf]
    %v28 = vld [vmem:[%s2] sm:$0x1]
    %v30 = vperm.slane %v28, 0
    %v36 = vunpack.c.l.b16 %v24
    %v37 = vunpack.c.l.b16 %v25
    %v38 = vunpack.c.l.b16 %v26
    %v39 = vunpack.c.l.b16 %v27
    %v40 = vpack.c.b16 %v37, %v36
    %v41 = vpack.c.b16 %v39, %v38
    %vm44 = vcmask 261120
    %v46 = vsel %vm44, %v23, 0
    %48 = vmatpush.bf16.msra.mxu0 0
    %49 = vmatpush.bf16.msra.mxu0 0
    %50 = vmatpush.bf16.msra.mxu0 0
    %51 = vmatpush.bf16.msra.mxu0 0
    %52 = vmatpush.bf16.msra.mxu0 0
    %53 = vmatpush.bf16.msra.mxu0 0
    %54 = vmatpush.bf16.msra.mxu0 %v41
    %55 = vmatpush.bf16.msra.mxu0 %v40
    %56 = vmatmul.bf16.gmra.mxu0 %v46
    %v57 = vpop.f32.mrf.mxu0
    %v58 = vadd.f32 %v30, %v57
    %v59 = vpop.f32.mrf.mxu0
    %60 = vdwg.mxu0
    %v61 = vmax.f32 %v58, 0.0
    %v62 = vpack.c.bf16 %v61, %v61
    %v63 = vld [vmem:[%s3] sm:$0xf]
    %v64 = vld [vmem:[%s3 + $0x4] sm:$0xf]
    %v65 = vld [vmem:[%s3 + $0x8] sm:$0xf]
    %v66 = vld [vmem:[%s3 + $0xc] sm:$0xf]
    %v67 = vld [vmem:[%s3 + $0x10] sm:$0xf]
    %v68 = vld [vmem:[%s3 + $0x14] sm:$0xf]
    %v69 = vld [vmem:[%s3 + $0x18] sm:$0xf]
    %v70 = vld [vmem:[%s3 + $0x1c] sm:$0xf]
    %v71 = vld [vmem:[%s3 + $0x20] sm:$0xf]
    %v72 = vld [vmem:[%s3 + $0x24] sm:$0xf]
    %v73 = vld [vmem:[%s3 + $0x28] sm:$0xf]
    %v74 = vld [vmem:[%s3 + $0x2c] sm:$0xf]
    %v75 = vld [vmem:[%s3 + $0x30] sm:$0xf]
    %v76 = vld [vmem:[%s3 + $0x34] sm:$0xf]
    %v77 = vld [vmem:[%s3 + $0x38] sm:$0xf]
    %v78 = vld [vmem:[%s3 + $0x3c] sm:$0xf]
    %v79 = vld [vmem:[%s4] sm:$0x1]
    %v81 = vperm.slane %v79, 0
    %v99 = vunpack.c.l.b16 %v63
    %v100 = vunpack.c.l.b16 %v64
    %v101 = vunpack.c.l.b16 %v65
    %v102 = vunpack.c.l.b16 %v66
    %v103 = vunpack.c.l.b16 %v67
    %v104 = vunpack.c.l.b16 %v68
    %v105 = vunpack.c.l.b16 %v69
    %v106 = vunpack.c.l.b16 %v70
    %v107 = vunpack.c.l.b16 %v71
    %v108 = vunpack.c.l.b16 %v72
    %v109 = vunpack.c.l.b16 %v73
    %v110 = vunpack.c.l.b16 %v74
    %v111 = vunpack.c.l.b16 %v75
    %v112 = vunpack.c.l.b16 %v76
    %v113 = vunpack.c.l.b16 %v77
    %v114 = vunpack.c.l.b16 %v78
    %v115 = vpack.c.b16 %v100, %v99
    %v116 = vpack.c.b16 %v102, %v101
    %v117 = vpack.c.b16 %v104, %v103
    %v118 = vpack.c.b16 %v106, %v105
    %v119 = vpack.c.b16 %v108, %v107
    %v120 = vpack.c.b16 %v110, %v109
    %v121 = vpack.c.b16 %v112, %v111
    %v122 = vpack.c.b16 %v114, %v113
    %131 = vmatpush.bf16.msra.mxu0 %v122
    %132 = vmatpush.bf16.msra.mxu0 %v121
    %133 = vmatpush.bf16.msra.mxu0 %v120
    %134 = vmatpush.bf16.msra.mxu0 %v119
    %135 = vmatpush.bf16.msra.mxu0 %v118
    %136 = vmatpush.bf16.msra.mxu0 %v117
    %137 = vmatpush.bf16.msra.mxu0 %v116
    %138 = vmatpush.bf16.msra.mxu0 %v115
    %139 = vmatmul.bf16.gmra.mxu0 %v62
    %v140 = vpop.f32.mrf.mxu0
    %v141 = vadd.f32 %v81, %v140
    %v142 = vpop.f32.mrf.mxu0
    %143 = vdwg.mxu0
    %vm144 = vcmask 130048
    %145 = vst.msk [vmem:[#allocation2] sm:$0xff] %vm144, %v141
    // Predicated region
    $region22: #{state_encoder_forward.1} parent=1 // pred_check
      _
    $region23: #{state_encoder_forward.1} parent=1 // pred_check_branch
      %147 = sbr.rel (0) target = $region25
    $region24: #{state_encoder_forward.1} parent=1 // pred_region
      %149 = vsyncadd [#allocation3], 0
      %s151 = sshll.u32 [#allocation2], 4
      %s152 = int_to_ptr.vmem [resolvable:$true] %s151
      %s153 = sshll.u32 %s5, 4
      %s154 = int_to_ptr.hbm [resolvable:$true] %s153
      %156 = dma.vmem_to_hbm [thread:$0]  %s152, 128, %s154, [#allocation3]
    $region25: #{state_encoder_forward.1} parent=1 // pred_fallthru
      _
    // Predicated region
    $region26: #{state_encoder_forward.1} parent=1 // pred_check
      _
    $region27: #{state_encoder_forward.1} parent=1 // pred_check_branch
      %158 = sbr.rel (0) target = $region29
    $region28: #{state_encoder_forward.1} parent=1 // pred_region
      %160 = dma.done [#allocation3], 128
    $region29: #{state_encoder_forward.1} parent=1 // pred_fallthru
      _
    %161 = vsyncpa [#allocation3], 1

</llo_original>
